<compile_context>
chip_gen: v7x
topology: tpu7x:2x2x1
jax: 0.10.0
libtpu: 0.0.40
codegen_flags: <defaults>
</compile_context>

<pallas_src>
import functools

import jax
import jax.numpy as jnp
import numpy as np
from jax.experimental import pallas as pl
from jax.experimental.pallas import tpu as pltpu


def _round_up(a: int, m: int) -> int:
    return ((a + m - 1) // m) * m


def bsconv1d_kernel(xm_ref, xh_ref, wp_ref, wd_ref, bd_ref, o_ref, *,
                    tile_t, halo_blk, kernel_size):
    """One (batch, sequence-tile) grid step.

    xm_ref: (1, tile_t,   C_in_p)  bf16  main input tile (channels-last, padded rows/lanes)
    xh_ref: (1, halo_blk, C_in_p)  bf16  halo rows immediately following the main tile
    wp_ref: (C_in_p, C_out_p)      bf16  pointwise W^T (bias folded into the ones channel)
    wd_ref: (K, C_out_p)           f32   depthwise W^T
    bd_ref: (1, C_out_p)           f32   depthwise bias
    o_ref : (1, tile_t, C_out_p)   bf16
    """
    w_rows = tile_t + halo_blk

    # Main tile + halo rows -> one contiguous window (sublane-aligned concat, bf16).
    xw = jnp.concatenate([xm_ref[0], xh_ref[0]], axis=0)          # (w_rows, C_in_p)

    # Pointwise 1x1 conv (+ bias via the ones channel) == channel matmul on the MXU.
    # Padded rows are all-zero (including the ones channel) so y == 0 there, exactly
    # like the zero padding nn.Conv1d applies to the depthwise input.
    y = jnp.dot(xw, wp_ref[...], preferred_element_type=jnp.float32)  # (w_rows, C_out_p)

    # Depthwise conv: K taps, shifted with the XLU (no unaligned sublane slices).
    wd = wd_ref[...]                                              # (K, C_out_p) f32
    acc = y[:tile_t, :] * wd[0:1, :]
    for k in range(1, kernel_size):                               # small static unroll
        y_k = pltpu.roll(y, shift=w_rows - k, axis=0)             # y_k[i] == y[i + k]
        acc = acc + y_k[:tile_t, :] * wd[k:k + 1, :]
    acc = acc + bd_ref[...]                                       # depthwise bias once

    o_ref[0] = acc.astype(o_ref.dtype)


def bsconv1d(x, pointwise_weight, pointwise_bias, depthwise_weight, depthwise_bias,
             *, kernel_size, padding, max_tile_t=512):
    """x: (B, C_in, L) -> (B, C_out, L_out), matching PyTorch BSConv1d.forward."""
    B, C_in, L = x.shape
    C_out = pointwise_weight.shape[0]
    L_out = L + 2 * padding - kernel_size + 1
    assert L_out >= 1, "sequence too short for this kernel_size/padding"
    assert pointwise_weight.shape == (C_out, C_in, 1)
    assert depthwise_weight.shape == (C_out, 1, kernel_size)

    # Lane-dense channel padding; the +1 input lane is the "ones" channel that folds the
    # pointwise bias into the matmul and keeps padded rows exactly zero.
    C_in_p = _round_up(C_in + 1, 128)
    C_out_p = _round_up(C_out, 128)

    # Halo block (covers the K-1 depthwise lookahead) and sequence tile, both multiples
    # of 16 so bf16 blocks and the halo block index map stay aligned.
    halo_blk = max(_round_up(kernel_size - 1, 16), 16)
    tile_t = min(_round_up(max_tile_t, halo_blk), _round_up(L_out, halo_blk))
    assert tile_t % halo_blk == 0
    n_tiles = -(-L_out // tile_t)
    total_rows = n_tiles * tile_t + halo_blk
    tiles_per_halo = tile_t // halo_blk

    # Channels-last bf16 with the ones channel appended, then zero-pad rows (depthwise
    # padding + tile slack) and channel lanes in one fused pad (no zeros+at[].set pass).
    x_cl = jnp.transpose(x, (0, 2, 1)).astype(jnp.bfloat16)                 # (B, L, C_in)
    x_cl = jnp.pad(x_cl, ((0, 0), (0, 0), (0, 1)), constant_values=1.0)     # ones channel
    x_pad = jnp.pad(
        x_cl,
        ((0, 0), (padding, total_rows - padding - L), (0, C_in_p - C_in - 1)))

    wp = jnp.zeros((C_in_p, C_out_p), jnp.float32)
    wp = wp.at[:C_in, :C_out].set(
        jnp.transpose(pointwise_weight[:, :, 0]).astype(jnp.float32))
    wp = wp.at[C_in, :C_out].set(pointwise_bias.astype(jnp.float32))  # bias -> ones lane
    wp = wp.astype(jnp.bfloat16)

    wd = jnp.zeros((kernel_size, C_out_p), jnp.float32)
    wd = wd.at[:, :C_out].set(
        jnp.transpose(depthwise_weight[:, 0, :]).astype(jnp.float32))
    bd = jnp.zeros((1, C_out_p), jnp.float32).at[0, :C_out].set(
        depthwise_bias.astype(jnp.float32))

    # Explicit VMEM budget: double-buffered blocks + in-kernel temporaries, 2x headroom,
    # clamped to stay valid on v5e/v6e (128 MiB) and v7x (64 MiB physical per TC).
    w_rows = tile_t + halo_blk
    vmem_est = (2 * tile_t * C_in_p * 2            # main input block (bf16, 2 buffers)
                + 2 * halo_blk * C_in_p * 2        # halo block
                + 2 * (C_in_p * C_out_p * 2 + kernel_size * C_out_p * 4 + C_out_p * 4)
                + 2 * tile_t * C_out_p * 2         # bf16 output block (2 buffers)
                + w_rows * C_in_p * 2              # concat window
                + 3 * w_rows * C_out_p * 4)        # y / rolled tap / acc temporaries
    vmem_limit = int(min(max(2 * vmem_est, 32 << 20), 60 << 20))

    kernel = functools.partial(bsconv1d_kernel, tile_t=tile_t, halo_blk=halo_blk,
                               kernel_size=kernel_size)
    out_padded = pl.pallas_call(
        kernel,
        out_shape=jax.ShapeDtypeStruct((B, n_tiles * tile_t, C_out_p), jnp.bfloat16),
        grid_spec=pltpu.PrefetchScalarGridSpec(
            num_scalar_prefetch=0,
            grid=(B, n_tiles),
            in_specs=[
                # main sequence tile
                pl.BlockSpec((1, tile_t, C_in_p), lambda b, j: (b, j, 0)),
                # halo rows right after the main tile (same array, second view)
                pl.BlockSpec((1, halo_blk, C_in_p),
                             lambda b, j: (b, (j + 1) * tiles_per_halo, 0)),
                pl.BlockSpec((C_in_p, C_out_p), lambda b, j: (0, 0)),       # pointwise W^T
                pl.BlockSpec((kernel_size, C_out_p), lambda b, j: (0, 0)),  # depthwise W^T
                pl.BlockSpec((1, C_out_p), lambda b, j: (0, 0)),            # depthwise bias
            ],
            out_specs=pl.BlockSpec((1, tile_t, C_out_p), lambda b, j: (b, j, 0)),
        ),
        compiler_params=pltpu.CompilerParams(
            dimension_semantics=("parallel", "parallel"),
            vmem_limit_bytes=vmem_limit),
    )(x_pad, x_pad, wp, wd, bd)

    out = out_padded[:, :L_out, :C_out].astype(x.dtype)
    return jnp.transpose(out, (0, 2, 1))                # back to (B, C_out, L_out)


def bsconv1d_reference(x, pointwise_weight, pointwise_bias, depthwise_weight,
                       depthwise_bias, *, kernel_size, padding):
    """Pure-JAX f32 reference mirroring the PyTorch BSConv1d forward."""
    B, C_in, L = x.shape
    C_out = pointwise_weight.shape[0]
    L_out = L + 2 * padding - kernel_size + 1
    y = jnp.einsum("oi,bil->bol", pointwise_weight[:, :, 0], x) \
        + pointwise_bias[None, :, None]
    ypad = jnp.pad(y, ((0, 0), (0, 0), (padding, padding)))
    out = jnp.broadcast_to(depthwise_bias[None, :, None], (B, C_out, L_out))
    out = out.astype(jnp.float32)
    for k in range(kernel_size):
        out = out + depthwise_weight[:, 0, k][None, :, None] * ypad[:, :, k:k + L_out]
    return out


if __name__ == "__main__":
    # Small shapes consistent with the module; exercises channel padding (12+1, 20 -> 128),
    # the halo block, and the boundary rows that were previously wrong.
    B, C_in, C_out, L = 2, 12, 20, 300
    kernel_size, padding = 3, 1

    key = jax.random.PRNGKey(0)
    kx, k1, k2, k3, k4 = jax.random.split(key, 5)
    x = jax.random.normal(kx, (B, C_in, L), jnp.float32)
    # PyTorch parameter shapes: pointwise (C_out, C_in, 1), depthwise (C_out, 1, K)
    pw_w = jax.random.normal(k1, (C_out, C_in, 1), jnp.float32) * 0.3
    pw_b = jax.random.normal(k2, (C_out,), jnp.float32) * 0.1
    dw_w = jax.random.normal(k3, (C_out, 1, kernel_size), jnp.float32) * 0.3
    dw_b = jax.random.normal(k4, (C_out,), jnp.float32) * 0.1

    out = bsconv1d(x, pw_w, pw_b, dw_w, dw_b,
                   kernel_size=kernel_size, padding=padding)
    out = jax.block_until_ready(out)

    ref = bsconv1d_reference(x, pw_w, pw_b, dw_w, dw_b,
                             kernel_size=kernel_size, padding=padding)
    # Tolerance accounts for bf16 MXU inputs (f32 accumulation) and the bf16 output store.
    np.testing.assert_allclose(np.asarray(out), np.asarray(ref), rtol=2e-2, atol=2e-2)

    print("KERNEL_OK")
</pallas_src>

<mosaic_0001>
module attributes {stable_mosaic.version = 11 : i64} {
  func.func @bsconv1d_kernel(%arg0: i32, %arg1: i32, %arg2: memref<1x304x128xbf16, #tpu.memory_space<vmem>>, %arg3: memref<1x16x128xbf16, #tpu.memory_space<vmem>>, %arg4: memref<128x128xbf16, #tpu.memory_space<vmem>>, %arg5: memref<3x128xf32, #tpu.memory_space<vmem>>, %arg6: memref<1x128xf32, #tpu.memory_space<vmem>>, %arg7: memref<1x304x128xbf16, #tpu.memory_space<vmem>>) attributes {dimension_semantics = [#tpu.dimension_semantics<parallel>, #tpu.dimension_semantics<parallel>], iteration_bounds = array<i64: 2, 1>, scalar_prefetch = 0 : i64, scratch_operands = 0 : i64, tpu.core_type = #tpu.core_type<tc>, window_params = [{transform_indices = @transform_0, window_bounds = array<i64: 1, 304, 128>}, {transform_indices = @transform_1, window_bounds = array<i64: 1, 16, 128>}, {pipeline_mode = #tpu.pipeline_mode<synchronous>, transform_indices = @transform_2, window_bounds = array<i64: 128, 128>}, {pipeline_mode = #tpu.pipeline_mode<synchronous>, transform_indices = @transform_3, window_bounds = array<i64: 3, 128>}, {pipeline_mode = #tpu.pipeline_mode<synchronous>, transform_indices = @transform_4, window_bounds = array<i64: 1, 128>}, {transform_indices = @transform_5, window_bounds = array<i64: 1, 304, 128>}]} {
    %c0 = arith.constant 0 : index
    %c0_0 = arith.constant 0 : index
    %c0_1 = arith.constant 0 : index
    %0 = vector.load %arg2[%c0, %c0_0, %c0_1] : memref<1x304x128xbf16, #tpu.memory_space<vmem>>, vector<1x304x128xbf16>
    %1 = vector.shape_cast %0 : vector<1x304x128xbf16> to vector<304x128xbf16>
    %c0_2 = arith.constant 0 : index
    %c0_3 = arith.constant 0 : index
    %c0_4 = arith.constant 0 : index
    %2 = vector.load %arg3[%c0_2, %c0_3, %c0_4] : memref<1x16x128xbf16, #tpu.memory_space<vmem>>, vector<1x16x128xbf16>
    %3 = vector.shape_cast %2 : vector<1x16x128xbf16> to vector<16x128xbf16>
    %4 = tpu.concatenate %1, %3 in 0 : vector<304x128xbf16>, vector<16x128xbf16> -> vector<320x128xbf16>
    %c0_5 = arith.constant 0 : index
    %c0_6 = arith.constant 0 : index
    %5 = vector.load %arg4[%c0_5, %c0_6] : memref<128x128xbf16, #tpu.memory_space<vmem>>, vector<128x128xbf16>
    %cst = arith.constant dense<0.000000e+00> : vector<320x128xf32>
    %6 = tpu.matmul %4, %5, %cst {dimension_numbers = #tpu.dot_dimension_numbers<[1], [0], [0], [1], [0, 0, 1, 1], [], []>} : vector<320x128xbf16>, vector<128x128xbf16>, vector<320x128xf32> -> vector<320x128xf32>
    %c0_7 = arith.constant 0 : index
    %c0_8 = arith.constant 0 : index
    %7 = vector.load %arg5[%c0_7, %c0_8] : memref<3x128xf32, #tpu.memory_space<vmem>>, vector<3x128xf32>
    %8 = vector.extract_strided_slice %6 {offsets = [0, 0], sizes = [304, 128], strides = [1, 1]} : vector<320x128xf32> to vector<304x128xf32>
    %9 = vector.extract_strided_slice %7 {offsets = [0, 0], sizes = [1, 128], strides = [1, 1]} : vector<3x128xf32> to vector<1x128xf32>
    %10 = vector.broadcast %9 : vector<1x128xf32> to vector<304x128xf32>
    %11 = arith.mulf %8, %10 : vector<304x128xf32>
    %c319_i32 = arith.constant 319 : i32
    %12 = tpu.dynamic_rotate %6 by %c319_i32 dim 0 : vector<320x128xf32>, i32 -> vector<320x128xf32>
    %13 = vector.extract_strided_slice %12 {offsets = [0, 0], sizes = [304, 128], strides = [1, 1]} : vector<320x128xf32> to vector<304x128xf32>
    %14 = vector.extract_strided_slice %7 {offsets = [1, 0], sizes = [1, 128], strides = [1, 1]} : vector<3x128xf32> to vector<1x128xf32>
    %15 = vector.broadcast %14 : vector<1x128xf32> to vector<304x128xf32>
    %16 = arith.mulf %13, %15 : vector<304x128xf32>
    %17 = arith.addf %11, %16 : vector<304x128xf32>
    %c318_i32 = arith.constant 318 : i32
    %18 = tpu.dynamic_rotate %6 by %c318_i32 dim 0 : vector<320x128xf32>, i32 -> vector<320x128xf32>
    %19 = vector.extract_strided_slice %18 {offsets = [0, 0], sizes = [304, 128], strides = [1, 1]} : vector<320x128xf32> to vector<304x128xf32>
    %20 = vector.extract_strided_slice %7 {offsets = [2, 0], sizes = [1, 128], strides = [1, 1]} : vector<3x128xf32> to vector<1x128xf32>
    %21 = vector.broadcast %20 : vector<1x128xf32> to vector<304x128xf32>
    %22 = arith.mulf %19, %21 : vector<304x128xf32>
    %23 = arith.addf %17, %22 : vector<304x128xf32>
    %c0_9 = arith.constant 0 : index
    %c0_10 = arith.constant 0 : index
    %24 = vector.load %arg6[%c0_9, %c0_10] : memref<1x128xf32, #tpu.memory_space<vmem>>, vector<1x128xf32>
    %25 = vector.broadcast %24 : vector<1x128xf32> to vector<304x128xf32>
    %26 = arith.addf %23, %25 : vector<304x128xf32>
    %27 = arith.truncf %26 : vector<304x128xf32> to vector<304x128xbf16>
    %c0_11 = arith.constant 0 : index
    %c0_12 = arith.constant 0 : index
    %c0_13 = arith.constant 0 : index
    %28 = vector.load %arg7[%c0_11, %c0_12, %c0_13] : memref<1x304x128xbf16, #tpu.memory_space<vmem>>, vector<1x304x128xbf16>
    %29 = vector.shape_cast %28 : vector<1x304x128xbf16> to vector<304x128xbf16>
    %30 = vector.shape_cast %27 : vector<304x128xbf16> to vector<1x304x128xbf16>
    tpu.vector_store %arg7[%c0_11, %c0_12, %c0_13], %30 {strides = array<i32>} : memref<1x304x128xbf16, #tpu.memory_space<vmem>>, vector<1x304x128xbf16>,
    return
  }
  func.func @transform_0(%arg0: i32, %arg1: i32) -> (i32, i32, i32) {
    %c0_i32 = arith.constant 0 : i32
    %c0_i32_0 = arith.constant 0 : i32
    return %arg0, %arg1, %c0_i32 : i32, i32, i32
  }
  func.func @transform_1(%arg0: i32, %arg1: i32) -> (i32, i32, i32) {
    %c1_i32 = arith.constant 1 : i32
    %0 = arith.addi %arg1, %c1_i32 : i32
    %c19_i32 = arith.constant 19 : i32
    %1 = arith.muli %0, %c19_i32 : i32
    %c0_i32 = arith.constant 0 : i32
    %c0_i32_0 = arith.constant 0 : i32
    return %arg0, %1, %c0_i32 : i32, i32, i32
  }
  func.func @transform_2(%arg0: i32, %arg1: i32) -> (i32, i32) {
    %c0_i32 = arith.constant 0 : i32
    %c0_i32_0 = arith.constant 0 : i32
    %c0_i32_1 = arith.constant 0 : i32
    return %c0_i32, %c0_i32_0 : i32, i32
  }
  func.func @transform_3(%arg0: i32, %arg1: i32) -> (i32, i32) {
    %c0_i32 = arith.constant 0 : i32
    %c0_i32_0 = arith.constant 0 : i32
    %c0_i32_1 = arith.constant 0 : i32
    return %c0_i32, %c0_i32_0 : i32, i32
  }
  func.func @transform_4(%arg0: i32, %arg1: i32) -> (i32, i32) {
    %c0_i32 = arith.constant 0 : i32
    %c0_i32_0 = arith.constant 0 : i32
    %c0_i32_1 = arith.constant 0 : i32
    return %c0_i32, %c0_i32_0 : i32, i32
  }
  func.func @transform_5(%arg0: i32, %arg1: i32) -> (i32, i32, i32) {
    %c0_i32 = arith.constant 0 : i32
    %c0_i32_0 = arith.constant 0 : i32
    return %arg0, %arg1, %c0_i32 : i32, i32, i32
  }
}

</mosaic_0001>

<llo_original>
// kernel: tpu_custom_call.1
$region0: #{tpu_custom_call.1}
  #allocation0 [shape = 'u32[]', space=smem, size = 0x4, offset = 0x4, fixed_abs, tag = 'smem constant byte address 0x4 - core index']
  #allocation1 [shape = 'u32[144,128]{1,0:T(1,128)}', space=vmem, size = 0x12000, scoped, tag = 'internal scratch']
  %s0 = inlined_call_operand.hbm [shape: bf16[2,320,128], index: 0, kind: input, shape index: {}]
  %s1 = inlined_call_operand.hbm [shape: bf16[2,320,128], index: 1, kind: input, shape index: {}]
  %s2 = inlined_call_operand.hbm [shape: bf16[128,128], index: 2, kind: input, shape index: {}]
  %s3 = inlined_call_operand.vmem [shape: f32[3,128], index: 3, kind: input, shape index: {}]
  %s4 = inlined_call_operand.vmem [shape: f32[1,128], index: 4, kind: input, shape index: {}]
  %s5 = inlined_call_operand.hbm [shape: bf16[2,304,128], index: 5, kind: output, shape index: {}]
  %s6 = sld [smem:[#allocation0]]
  $region65: #{tpu_custom_call.1} parent=0
    _
  %s8 = ssub.s32 1, %s6
  %s9 = scalar_select 0, %s8, %s6
  $region1: #{tpu_custom_call.1} parent=0
    #allocation2 [shape = 'u8[155648]{0}', space=vmem, size = 0x26000, scoped, tag = 'input window, operand 0']
    #allocation3 [shape = 's32[2]{0}', space=sflag, size = 0x8, scoped, tag = 'scoped memory for tpu_custom_call.1']
    #allocation4 [shape = 's32[2]{0}', space=sflag, size = 0x8, scoped, tag = 'scoped memory for tpu_custom_call.1']
    #allocation5 [shape = 'u8[8192]{0}', space=vmem, size = 0x2000, scoped, tag = 'input window, operand 1']
    #allocation6 [shape = 's32[2]{0}', space=sflag, size = 0x8, scoped, tag = 'scoped memory for tpu_custom_call.1']
    #allocation7 [shape = 'u8[32768]{0}', space=vmem, size = 0x8000, scoped, tag = 'input window, operand 2, single buffered']
    #allocation8 [shape = 'u8[155648]{0}', space=vmem, size = 0x26000, scoped, tag = 'output window, operand 0']
    %10 = vsyncpa [#allocation3], 0
    %s11 = scalar_lea.sflag [#allocation3], 1
    %12 = vsyncpa %s11, 0
    %13 = vsyncpa [#allocation6], 0
    %s14 = scalar_lea.sflag [#allocation6], 1
    %15 = vsyncpa %s14, 0
    %16 = vsyncpa [#allocation4], 0
    %s17 = scalar_lea.sflag [#allocation4], 1
    %18 = vsyncpa %s17, 0
    loop: start=0, step=1, limit=4
    $region2: #{tpu_custom_call.1} parent=1 // loop_pre_header
      _
    $region3: #{tpu_custom_call.1} parent=1 // loop_header
      %s20 = sphi 0, %s24
      %p21 = scmp.ge.s32.totalorder %s20, 4
      %s27 = sphi 0, %s39
      %s28 = sphi 0, %s35
      %s29 = sphi 0, %s27
      %s30 = sphi 0, %s28
      %s31 = sphi 0, %s29
      %s32 = sphi 0, %s30
      %s44 = sphi 0, %s46
      %s47 = sphi 0, %s44
      %s48 = sphi 0, %s47
      %s64 = sphi 0, %s48
      %s76 = sphi 0, %s78
      %s79 = sphi 0, %s76
      %s80 = sphi 0, %s79
      %s96 = sphi 0, %s80
      %s100 = sphi 0, %s100
      %s102 = sphi 0, %s100
      %s103 = sphi 0, %s102
      %s117 = sphi 0, %s103
      %s121 = sphi 0, %s121
      %s123 = sphi 0, %s121
      %s124 = sphi 0, %s123
      %s138 = sphi 0, %s124
      %s142 = sphi 0, %s142
      %s144 = sphi 0, %s142
      %s145 = sphi 0, %s144
      %s159 = sphi 0, %s145
      %s167 = sphi 0, %s169
      %s170 = sphi 0, %s167
      %s171 = sphi 0, %s170
      %s187 = sphi 0, %s171
    $region4: #{tpu_custom_call.1} parent=1 // loop_header_branch
      %23 = sbr.rel (%p21) target = $region8
    $region5: #{tpu_custom_call.1} parent=1 // loop_body
      %s25 = ssub.s32 %s20, 1
      %s26 = ssub.s32 %s20, 2
      %s33 = sadd.s32 1, %s28
      %p34 = scmp.ge.s32.totalorder %s33, 1
      %s35 = scalar_select %p34, 0, %s33
      %s36 = sadd.s32 1, %s27
      %s37 = scalar_select %p34, %s36, %s27
      %p38 = scmp.ge.s32.totalorder %s37, 2
      %s39 = scalar_select %p38, 0, %s37
      %s40 = ssub.s32 %s27, %s39
      %s41 = ssub.s32 %s28, %s35
      %s42 = sor.u32 %s40, %s41
      %p43 = scmp.eq.s32.totalorder %s42, 0
      %s45 = sadd.s32 %s44, 1
      %s46 = scalar_select %p43, %s44, %s45
      %p49 = pneg %p43
      %p50 = scmp.eq.s32.totalorder %s20, 1
      %p51 = por %p49, %p50
      %p52 = scmp.ne.s32.totalorder %s44, %s47
      %p53 = scmp.eq.s32.totalorder %s20, 0
      %p54 = por %p52, %p53
      %p55 = scmp.ne.s32.totalorder %s44, %s47
      %p56 = scmp.eq.s32.totalorder %s25, 1
      %p57 = por %p55, %p56
      %p58 = scmp.ne.s32.totalorder %s47, %s48
      %p59 = scmp.eq.s32.totalorder %s25, 0
      %p60 = por %p58, %p59
      %p61 = scmp.ne.s32.totalorder %s47, %s48
      %p62 = scmp.eq.s32.totalorder %s26, 1
      %p63 = por %p61, %p62
      %p65 = scmp.ne.s32.totalorder %s48, %s64
      %p66 = scmp.eq.s32.totalorder %s26, 0
      %p67 = por %p65, %p66
      %s68 = sadd.s32 %s28, 1
      %s69 = smul.u32 %s68, 19
      %s70 = sadd.s32 %s35, 1
      %s71 = smul.u32 %s70, 19
      %s72 = ssub.s32 %s27, %s39
      %s73 = ssub.s32 %s69, %s71
      %s74 = sor.u32 %s72, %s73
      %p75 = scmp.eq.s32.totalorder %s74, 0
      %s77 = sadd.s32 %s76, 1
      %s78 = scalar_select %p75, %s76, %s77
      %p81 = pneg %p75
      %p82 = scmp.eq.s32.totalorder %s20, 1
      %p83 = por %p81, %p82
      %p84 = scmp.ne.s32.totalorder %s76, %s79
      %p85 = scmp.eq.s32.totalorder %s20, 0
      %p86 = por %p84, %p85
      %p87 = scmp.ne.s32.totalorder %s76, %s79
      %p88 = scmp.eq.s32.totalorder %s25, 1
      %p89 = por %p87, %p88
      %p90 = scmp.ne.s32.totalorder %s79, %s80
      %p91 = scmp.eq.s32.totalorder %s25, 0
      %p92 = por %p90, %p91
      %p93 = scmp.ne.s32.totalorder %s79, %s80
      %p94 = scmp.eq.s32.totalorder %s26, 1
      %p95 = por %p93, %p94
      %p97 = scmp.ne.s32.totalorder %s80, %s96
      %p98 = scmp.eq.s32.totalorder %s26, 0
      %p99 = por %p97, %p98
      %s101 = sadd.s32 %s100, 1
      %p104 = scmp.eq.s32.totalorder %s20, 1
      %p105 = scmp.ne.s32.totalorder %s100, %s102
      %p106 = scmp.eq.s32.totalorder %s20, 0
      %p107 = por %p105, %p106
      %p108 = scmp.ne.s32.totalorder %s100, %s102
      %p109 = scmp.eq.s32.totalorder %s25, 1
      %p110 = por %p108, %p109
      %p111 = scmp.ne.s32.totalorder %s102, %s103
      %p112 = scmp.eq.s32.totalorder %s25, 0
      %p113 = por %p111, %p112
      %p114 = scmp.ne.s32.totalorder %s102, %s103
      %p115 = scmp.eq.s32.totalorder %s26, 1
      %p116 = por %p114, %p115
      %p118 = scmp.ne.s32.totalorder %s103, %s117
      %p119 = scmp.eq.s32.totalorder %s26, 0
      %p120 = por %p118, %p119
      %s122 = sadd.s32 %s121, 1
      %p125 = scmp.eq.s32.totalorder %s20, 1
      %p126 = scmp.ne.s32.totalorder %s121, %s123
      %p127 = scmp.eq.s32.totalorder %s20, 0
      %p128 = por %p126, %p127
      %p129 = scmp.ne.s32.totalorder %s121, %s123
      %p130 = scmp.eq.s32.totalorder %s25, 1
      %p131 = por %p129, %p130
      %p132 = scmp.ne.s32.totalorder %s123, %s124
      %p133 = scmp.eq.s32.totalorder %s25, 0
      %p134 = por %p132, %p133
      %p135 = scmp.ne.s32.totalorder %s123, %s124
      %p136 = scmp.eq.s32.totalorder %s26, 1
      %p137 = por %p135, %p136
      %p139 = scmp.ne.s32.totalorder %s124, %s138
      %p140 = scmp.eq.s32.totalorder %s26, 0
      %p141 = por %p139, %p140
      %s143 = sadd.s32 %s142, 1
      %p146 = scmp.eq.s32.totalorder %s20, 1
      %p147 = scmp.ne.s32.totalorder %s142, %s144
      %p148 = scmp.eq.s32.totalorder %s20, 0
      %p149 = por %p147, %p148
      %p150 = scmp.ne.s32.totalorder %s142, %s144
      %p151 = scmp.eq.s32.totalorder %s25, 1
      %p152 = por %p150, %p151
      %p153 = scmp.ne.s32.totalorder %s144, %s145
      %p154 = scmp.eq.s32.totalorder %s25, 0
      %p155 = por %p153, %p154
      %p156 = scmp.ne.s32.totalorder %s144, %s145
      %p157 = scmp.eq.s32.totalorder %s26, 1
      %p158 = por %p156, %p157
      %p160 = scmp.ne.s32.totalorder %s145, %s159
      %p161 = scmp.eq.s32.totalorder %s26, 0
      %p162 = por %p160, %p161
      %s163 = ssub.s32 %s27, %s39
      %s164 = ssub.s32 %s28, %s35
      %s165 = sor.u32 %s163, %s164
      %p166 = scmp.eq.s32.totalorder %s165, 0
      %s168 = sadd.s32 %s167, 1
      %s169 = scalar_select %p166, %s167, %s168
      %p172 = pneg %p166
      %p173 = scmp.eq.s32.totalorder %s20, 1
      %p174 = por %p172, %p173
      %p175 = scmp.ne.s32.totalorder %s167, %s170
      %p176 = scmp.eq.s32.totalorder %s20, 0
      %p177 = por %p175, %p176
      %p178 = scmp.ne.s32.totalorder %s167, %s170
      %p179 = scmp.eq.s32.totalorder %s25, 1
      %p180 = por %p178, %p179
      %p181 = scmp.ne.s32.totalorder %s170, %s171
      %p182 = scmp.eq.s32.totalorder %s25, 0
      %p183 = por %p181, %p182
      %p184 = scmp.ne.s32.totalorder %s170, %s171
      %p185 = scmp.eq.s32.totalorder %s26, 1
      %p186 = por %p184, %p185
      %p188 = scmp.ne.s32.totalorder %s171, %s187
      %p189 = scmp.eq.s32.totalorder %s26, 0
      %p190 = por %p188, %p189
      %p191 = scmp.le.s32.totalorder 1, %s20
      %p192 = scmp.lt.s32.totalorder %s20, 3
      %p193 = pnand %p191, %p192
      %p194 = pneg %p193
      // Predicated region
      $region9: #{tpu_custom_call.1} parent=5 // pred_check
        _
      $region10: #{tpu_custom_call.1} parent=5 // pred_check_branch
        %196 = sbr.rel (%p193) target = $region12
      $region11: #{tpu_custom_call.1} parent=5 // pred_region
        %s197 = ssub.s32 %s20, 1
        // Predicated region
        $region13: #{tpu_custom_call.1} parent=11 // pred_check
          %p198 = pneg %p113
        $region14: #{tpu_custom_call.1} parent=11 // pred_check_branch
          %200 = sbr.rel (%p198) target = $region16
        $region15: #{tpu_custom_call.1} parent=11 // pred_region
          %s202 = ssub.s32 1024, 1024
          %203 = vsyncadd [#allocation6], %s202
          %s204 = sshll.u32 [#allocation7], 4
          %s205 = int_to_ptr.vmem [resolvable:$true] %s204
          %210 = dma.hbm_to_vmem [thread:$0]  %s2, 1024, %s205, [#allocation6], 64, 64, 4
        $region16: #{tpu_custom_call.1} parent=11 // pred_fallthru
          _
        // Predicated region
        $region17: #{tpu_custom_call.1} parent=11 // pred_check
          %p211 = pneg %p134
        $region18: #{tpu_custom_call.1} parent=11 // pred_check_branch
          %213 = sbr.rel (%p211) target = $region20
        $region19: #{tpu_custom_call.1} parent=11 // pred_region
          _
        $region20: #{tpu_custom_call.1} parent=11 // pred_fallthru
          _
        // Predicated region
        $region21: #{tpu_custom_call.1} parent=11 // pred_check
          %p214 = pneg %p155
        $region22: #{tpu_custom_call.1} parent=11 // pred_check_branch
          %216 = sbr.rel (%p214) target = $region24
        $region23: #{tpu_custom_call.1} parent=11 // pred_region
          _
        $region24: #{tpu_custom_call.1} parent=11 // pred_fallthru
          _
      $region12: #{tpu_custom_call.1} parent=5 // pred_fallthru
        _
      %p217 = scmp.lt.s32.totalorder %s20, 2
      // Predicated region
      $region25: #{tpu_custom_call.1} parent=5 // pred_check
        %p218 = pneg %p217
      $region26: #{tpu_custom_call.1} parent=5 // pred_check_branch
        %220 = sbr.rel (%p218) target = $region28
      $region27: #{tpu_custom_call.1} parent=5 // pred_region
        // Predicated region
        $region29: #{tpu_custom_call.1} parent=27 // pred_check
          %p221 = pneg %p54
        $region30: #{tpu_custom_call.1} parent=27 // pred_check_branch
          %223 = sbr.rel (%p221) target = $region32
        $region31: #{tpu_custom_call.1} parent=27 // pred_region
          %s224 = sand.u32 %s44, 1
          %s225 = scalar_lea.sflag [#allocation3], %s224
          %s226 = sand.u32 %s44, 1
          %s227 = smul.addr %s226, 152
          %s228 = scalar_lea.vmem [#allocation2], %s227
          %s229 = smul.u32 38, %s28
          %s230 = ssub.s32 40, %s229
          %p231 = scmp.lt.s32.totalorder %s230, 38
          %s232 = scalar_select %p231, %s230, 38
          %s233 = smul.u32 64, %s232
          %s235 = ssub.s32 2432, %s233
          %236 = vsyncadd %s225, %s235
          %p237 = scmp.ne.s32.totalorder 0, %s233
          %s238 = smul.addr %s27, 40
          %s239 = sadd.s32 %s229, %s238
          %s240 = smul.addr %s239, 64
          %s241 = scalar_lea.hbm %s0, %s240
          %s242 = smul.u32 4, %s232
          %s243 = sshll.u32 %s228, 4
          %s244 = int_to_ptr.vmem [resolvable:$true] %s243
          %s245 = sshll.u32 %s242, 4
          %249 = dma.hbm_to_vmem [thread:$0]  (%p237), %s241, %s245, %s244, %s225, 64, 64, 4
        $region32: #{tpu_custom_call.1} parent=27 // pred_fallthru
          _
        // Predicated region
        $region33: #{tpu_custom_call.1} parent=27 // pred_check
          %p250 = pneg %p86
        $region34: #{tpu_custom_call.1} parent=27 // pred_check_branch
          %252 = sbr.rel (%p250) target = $region36
        $region35: #{tpu_custom_call.1} parent=27 // pred_region
          %s253 = sand.u32 %s20, 1
          %s254 = scalar_lea.sflag [#allocation6], %s253
          %s255 = sand.u32 %s76, 1
          %s256 = smul.addr %s255, 8
          %s257 = scalar_lea.vmem [#allocation5], %s256
          %s258 = sadd.s32 %s28, 1
          %s259 = smul.u32 %s258, 19
          %s260 = smul.u32 2, %s259
          %s262 = ssub.s32 128, 128
          %263 = vsyncadd %s254, %s262
          %s264 = smul.addr %s27, 40
          %s265 = sadd.s32 %s260, %s264
          %s266 = smul.addr %s265, 64
          %s267 = scalar_lea.hbm %s1, %s266
          %s268 = sshll.u32 %s257, 4
          %s269 = int_to_ptr.vmem [resolvable:$true] %s268
          %274 = dma.hbm_to_vmem [thread:$0]  %s267, 128, %s269, %s254, 64, 64, 4
        $region36: #{tpu_custom_call.1} parent=27 // pred_fallthru
          _
      $region28: #{tpu_custom_call.1} parent=5 // pred_fallthru
        _
      %p275 = scmp.le.s32.totalorder 1, %s20
      %p276 = scmp.lt.s32.totalorder %s20, 3
      %p277 = pnand %p275, %p276
      %p278 = pneg %p277
      // Predicated region
      $region37: #{tpu_custom_call.1} parent=5 // pred_check
        _
      $region38: #{tpu_custom_call.1} parent=5 // pred_check_branch
        %280 = sbr.rel (%p277) target = $region40
      $region39: #{tpu_custom_call.1} parent=5 // pred_region
        %s281 = ssub.s32 %s20, 1
        %s282 = sand.u32 %s47, 1
        %s283 = scalar_lea.sflag [#allocation3], %s282
        %s284 = sand.u32 %s47, 1
        %s285 = smul.addr %s284, 152
        %s286 = scalar_lea.vmem [#allocation2], %s285
        // Predicated region
        $region41: #{tpu_custom_call.1} parent=39 // pred_check
          %p287 = pneg %p60
        $region42: #{tpu_custom_call.1} parent=39 // pred_check_branch
          %289 = sbr.rel (%p287) target = $region44
        $region43: #{tpu_custom_call.1} parent=39 // pred_region
          %290 = dma.done %s283, 2432
        $region44: #{tpu_custom_call.1} parent=39 // pred_fallthru
          _
        %s291 = sand.u32 %s25, 1
        %s292 = scalar_lea.sflag [#allocation6], %s291
        %s293 = sand.u32 %s79, 1
        %s294 = smul.addr %s293, 8
        %s295 = scalar_lea.vmem [#allocation5], %s294
        // Predicated region
        $region45: #{tpu_custom_call.1} parent=39 // pred_check
          %p296 = pneg %p92
        $region46: #{tpu_custom_call.1} parent=39 // pred_check_branch
          %298 = sbr.rel (%p296) target = $region48
        $region47: #{tpu_custom_call.1} parent=39 // pred_region
          %299 = dma.done %s292, 128
        $region48: #{tpu_custom_call.1} parent=39 // pred_fallthru
          _
        // Predicated region
        $region49: #{tpu_custom_call.1} parent=39 // pred_check
          %p300 = pneg %p113
        $region50: #{tpu_custom_call.1} parent=39 // pred_check_branch
          %302 = sbr.rel (%p300) target = $region52
        $region51: #{tpu_custom_call.1} parent=39 // pred_region
          %303 = dma.done [#allocation6], 1024
        $region52: #{tpu_custom_call.1} parent=39 // pred_fallthru
          _
        %s304 = sand.u32 %s47, 1
        %s305 = scalar_lea.sflag [#allocation3], %s304
        %s306 = sand.u32 %s47, 1
        %s307 = smul.addr %s306, 152
        %s308 = scalar_lea.vmem [#allocation2], %s307
        %p309 = pneg %p60
        %p310 = pneg %p57
        %s311 = sand.u32 %s25, 1
        %s312 = scalar_lea.sflag [#allocation6], %s311
        %s313 = sand.u32 %s79, 1
        %s314 = smul.addr %s313, 8
        %s315 = scalar_lea.vmem [#allocation5], %s314
        %p316 = pneg %p92
        %p317 = pneg %p89
        %p318 = pneg %p113
        %p319 = pneg %p110
        %p320 = pneg %p134
        %p321 = pneg %p131
        %p322 = pneg %p155
        %p323 = pneg %p152
        %p324 = pneg %p183
        %p325 = pneg %p180
        %s326 = sand.u32 %s170, 1
        %s327 = scalar_lea.sflag [#allocation4], %s326
        %s328 = sand.u32 %s170, 1
        %s329 = smul.addr %s328, 152
        %s330 = scalar_lea.vmem [#allocation8], %s329
        %s331 = smul.u32 38, %s30
        %s332 = ssub.s32 40, %s331
        %p333 = scmp.lt.s32.totalorder %s332, 38
        %s334 = scalar_select %p333, %s332, 38
        %s335 = smul.u32 64, %s334
        %s336 = sadd.s32 %s30, 1
        %s337 = smul.u32 %s336, 19
        %s338 = smul.u32 2, %s337
        %s339 = smul.u32 38, %s30
        %v341 = vld [vmem:[%s286] sm:$0xf]
        %v342 = vld [vmem:[%s286 + $0x4] sm:$0xf]
        %v343 = vld [vmem:[%s286 + $0x8] sm:$0xf]
        %v344 = vld [vmem:[%s286 + $0xc] sm:$0xf]
        %v345 = vld [vmem:[%s286 + $0x10] sm:$0xf]
        %v346 = vld [vmem:[%s286 + $0x14] sm:$0xf]
        %v347 = vld [vmem:[%s286 + $0x18] sm:$0xf]
        %v348 = vld [vmem:[%s286 + $0x1c] sm:$0xf]
        %v349 = vld [vmem:[%s286 + $0x20] sm:$0xf]
        %v350 = vld [vmem:[%s286 + $0x24] sm:$0xf]
        %v351 = vld [vmem:[%s286 + $0x28] sm:$0xf]
        %v352 = vld [vmem:[%s286 + $0x2c] sm:$0xf]
        %v353 = vld [vmem:[%s286 + $0x30] sm:$0xf]
        %v354 = vld [vmem:[%s286 + $0x34] sm:$0xf]
        %v355 = vld [vmem:[%s286 + $0x38] sm:$0xf]
        %v356 = vld [vmem:[%s286 + $0x3c] sm:$0xf]
        %v357 = vld [vmem:[%s286 + $0x40] sm:$0xf]
        %v358 = vld [vmem:[%s286 + $0x44] sm:$0xf]
        %v359 = vld [vmem:[%s286 + $0x48] sm:$0xf]
        %v360 = vld [vmem:[%s286 + $0x4c] sm:$0xf]
        %v361 = vld [vmem:[%s286 + $0x50] sm:$0xf]
        %v362 = vld [vmem:[%s286 + $0x54] sm:$0xf]
        %v363 = vld [vmem:[%s286 + $0x58] sm:$0xf]
        %v364 = vld [vmem:[%s286 + $0x5c] sm:$0xf]
        %v365 = vld [vmem:[%s286 + $0x60] sm:$0xf]
        %v366 = vld [vmem:[%s286 + $0x64] sm:$0xf]
        %v367 = vld [vmem:[%s286 + $0x68] sm:$0xf]
        %v368 = vld [vmem:[%s286 + $0x6c] sm:$0xf]
        %v369 = vld [vmem:[%s286 + $0x70] sm:$0xf]
        %v370 = vld [vmem:[%s286 + $0x74] sm:$0xf]
        %v371 = vld [vmem:[%s286 + $0x78] sm:$0xf]
        %v372 = vld [vmem:[%s286 + $0x7c] sm:$0xf]
        %v373 = vld [vmem:[%s286 + $0x80] sm:$0xf]
        %v374 = vld [vmem:[%s286 + $0x84] sm:$0xf]
        %v375 = vld [vmem:[%s286 + $0x88] sm:$0xf]
        %v376 = vld [vmem:[%s286 + $0x8c] sm:$0xf]
        %v377 = vld [vmem:[%s286 + $0x90] sm:$0xf]
        %v378 = vld [vmem:[%s286 + $0x94] sm:$0xf]
        %v379 = vld [vmem:[%s295] sm:$0xf]
        %v380 = vld [vmem:[%s295 + $0x4] sm:$0xf]
        %v419 = vunpack.c.l.b16 %v341
        %v420 = vunpack.c.l.b16 %v342
        %v421 = vunpack.c.l.b16 %v343
        %v422 = vunpack.c.l.b16 %v344
        %v423 = vunpack.c.l.b16 %v345
        %v424 = vunpack.c.l.b16 %v346
        %v425 = vunpack.c.l.b16 %v347
        %v426 = vunpack.c.l.b16 %v348
        %v427 = vunpack.c.l.b16 %v349
        %v428 = vunpack.c.l.b16 %v350
        %v429 = vunpack.c.l.b16 %v351
        %v430 = vunpack.c.l.b16 %v352
        %v431 = vunpack.c.l.b16 %v353
        %v432 = vunpack.c.l.b16 %v354
        %v433 = vunpack.c.l.b16 %v355
        %v434 = vunpack.c.l.b16 %v356
        %v435 = vunpack.c.l.b16 %v357
        %v436 = vunpack.c.l.b16 %v358
        %v437 = vunpack.c.l.b16 %v359
        %v438 = vunpack.c.l.b16 %v360
        %v439 = vunpack.c.l.b16 %v361
        %v440 = vunpack.c.l.b16 %v362
        %v441 = vunpack.c.l.b16 %v363
        %v442 = vunpack.c.l.b16 %v364
        %v443 = vunpack.c.l.b16 %v365
        %v444 = vunpack.c.l.b16 %v366
        %v445 = vunpack.c.l.b16 %v367
        %v446 = vunpack.c.l.b16 %v368
        %v447 = vunpack.c.l.b16 %v369
        %v448 = vunpack.c.l.b16 %v370
        %v449 = vunpack.c.l.b16 %v371
        %v450 = vunpack.c.l.b16 %v372
        %v451 = vunpack.c.l.b16 %v373
        %v452 = vunpack.c.l.b16 %v374
        %v453 = vunpack.c.l.b16 %v375
        %v454 = vunpack.c.l.b16 %v376
        %v455 = vunpack.c.l.b16 %v377
        %v456 = vunpack.c.l.b16 %v378
        %v457 = vpack.c.b16 %v420, %v419
        %v458 = vpack.c.b16 %v422, %v421
        %v459 = vpack.c.b16 %v424, %v423
        %v460 = vpack.c.b16 %v426, %v425
        %v461 = vpack.c.b16 %v428, %v427
        %v462 = vpack.c.b16 %v430, %v429
        %v463 = vpack.c.b16 %v432, %v431
        %v464 = vpack.c.b16 %v434, %v433
        %v465 = vpack.c.b16 %v436, %v435
        %v466 = vpack.c.b16 %v438, %v437
        %v467 = vpack.c.b16 %v440, %v439
        %v468 = vpack.c.b16 %v442, %v441
        %v469 = vpack.c.b16 %v444, %v443
        %v470 = vpack.c.b16 %v446, %v445
        %v471 = vpack.c.b16 %v448, %v447
        %v472 = vpack.c.b16 %v450, %v449
        %v473 = vpack.c.b16 %v452, %v451
        %v474 = vpack.c.b16 %v454, %v453
        %v475 = vpack.c.b16 %v456, %v455
        %v497 = vunpack.c.l.b16 %v379
        %v498 = vunpack.c.l.b16 %v380
        %v499 = vpack.c.b16 %v498, %v497
        %v501 = vld [vmem:[#allocation7] sm:$0xf]
        %v502 = vld [vmem:[#allocation7 + $0x4] sm:$0xf]
        %v503 = vld [vmem:[#allocation7 + $0x8] sm:$0xf]
        %v504 = vld [vmem:[#allocation7 + $0xc] sm:$0xf]
        %v505 = vld [vmem:[#allocation7 + $0x10] sm:$0xf]
        %v506 = vld [vmem:[#allocation7 + $0x14] sm:$0xf]
        %v507 = vld [vmem:[#allocation7 + $0x18] sm:$0xf]
        %v508 = vld [vmem:[#allocation7 + $0x1c] sm:$0xf]
        %v509 = vld [vmem:[#allocation7 + $0x20] sm:$0xf]
        %v510 = vld [vmem:[#allocation7 + $0x24] sm:$0xf]
        %v511 = vld [vmem:[#allocation7 + $0x28] sm:$0xf]
        %v512 = vld [vmem:[#allocation7 + $0x2c] sm:$0xf]
        %v513 = vld [vmem:[#allocation7 + $0x30] sm:$0xf]
        %v514 = vld [vmem:[#allocation7 + $0x34] sm:$0xf]
        %v515 = vld [vmem:[#allocation7 + $0x38] sm:$0xf]
        %v516 = vld [vmem:[#allocation7 + $0x3c] sm:$0xf]
        %v533 = vunpack.c.l.b16 %v501
        %v534 = vunpack.c.l.b16 %v502
        %v535 = vunpack.c.l.b16 %v503
        %v536 = vunpack.c.l.b16 %v504
        %v537 = vunpack.c.l.b16 %v505
        %v538 = vunpack.c.l.b16 %v506
        %v539 = vunpack.c.l.b16 %v507
        %v540 = vunpack.c.l.b16 %v508
        %v541 = vunpack.c.l.b16 %v509
        %v542 = vunpack.c.l.b16 %v510
        %v543 = vunpack.c.l.b16 %v511
        %v544 = vunpack.c.l.b16 %v512
        %v545 = vunpack.c.l.b16 %v513
        %v546 = vunpack.c.l.b16 %v514
        %v547 = vunpack.c.l.b16 %v515
        %v548 = vunpack.c.l.b16 %v516
        %v549 = vpack.c.b16 %v534, %v533
        %v550 = vpack.c.b16 %v536, %v535
        %v551 = vpack.c.b16 %v538, %v537
        %v552 = vpack.c.b16 %v540, %v539
        %v553 = vpack.c.b16 %v542, %v541
        %v554 = vpack.c.b16 %v544, %v543
        %v555 = vpack.c.b16 %v546, %v545
        %v556 = vpack.c.b16 %v548, %v547
        %565 = vmatprep.subr.bf16.mxu0 0
        %566 = vmatpush1.bf16.msra.mxu0 %v549
        %567 = vmatprep.subr.bf16.mxu0 0
        %568 = vmatpush1.bf16.msra.mxu0 %v550
        %569 = vmatprep.subr.bf16.mxu0 0
        %570 = vmatpush1.bf16.msra.mxu0 %v551
        %571 = vmatprep.subr.bf16.mxu0 0
        %572 = vmatpush1.bf16.msra.mxu0 %v552
        %573 = vmatprep.subr.bf16.mxu0 0
        %574 = vmatpush1.bf16.msra.mxu0 %v553
        %575 = vmatprep.subr.bf16.mxu0 0
        %576 = vmatpush1.bf16.msra.mxu0 %v554
        %577 = vmatprep.subr.bf16.mxu0 0
        %578 = vmatpush1.bf16.msra.mxu0 %v555
        %579 = vmatprep.subr.bf16.mxu0 0
        %580 = vmatpush1.bf16.msra.mxu0 %v556
        %581 = vmatprep.subr.bf16.mxu0 0
        %582 = vmatpush1.bf16.msra.mxu0 0
        %583 = vmatprep.subr.bf16.mxu0 0
        %584 = vmatpush1.bf16.msra.mxu0 0
        %585 = vmatprep.subr.bf16.mxu0 0
        %586 = vmatpush1.bf16.msra.mxu0 0
        %587 = vmatprep.subr.bf16.mxu0 0
        %588 = vmatpush1.bf16.msra.mxu0 0
        %589 = vmatprep.subr.bf16.mxu0 0
        %590 = vmatpush1.bf16.msra.mxu0 0
        %591 = vmatprep.subr.bf16.mxu0 0
        %592 = vmatpush1.bf16.msra.mxu0 0
        %593 = vmatprep.subr.bf16.mxu0 0
        %594 = vmatpush1.bf16.msra.mxu0 0
        %595 = vmatprep.subr.bf16.mxu0 0
        %596 = vmatpush1.bf16.msra.mxu0 0
        %597 = vmatprep.mubr.bf16.mxu0 0
        %598 = vmatmul.mubr.bf16.gmra.mrb[0].mxu0 %v457
        %v599 = vpop.f32.mrb[0].mxu0
        %v600 = vadd.f32 0.0, %v599
        %v601 = vpop.f32.mrb[0].mxu0
        %v602 = vpop.f32.mrb[0].mxu0
        %v603 = vadd.f32 0.0, %v602
        %v604 = vpop.f32.mrb[0].mxu0
        %605 = vmatprep.mubr.bf16.mxu0 0
        %606 = vmatmul.mubr.bf16.gmra.mrb[0].mxu0 %v458
        %v607 = vpop.f32.mrb[0].mxu0
        %v608 = vadd.f32 0.0, %v607
        %v609 = vpop.f32.mrb[0].mxu0
        %v610 = vpop.f32.mrb[0].mxu0
        %v611 = vadd.f32 0.0, %v610
        %v612 = vpop.f32.mrb[0].mxu0
        %613 = vmatprep.mubr.bf16.mxu0 0
        %614 = vmatmul.mubr.bf16.gmra.mrb[0].mxu0 %v459
        %v615 = vpop.f32.mrb[0].mxu0
        %v616 = vadd.f32 0.0, %v615
        %v617 = vpop.f32.mrb[0].mxu0
        %v618 = vpop.f32.mrb[0].mxu0
        %v619 = vadd.f32 0.0, %v618
        %v620 = vpop.f32.mrb[0].mxu0
        %621 = vmatprep.mubr.bf16.mxu0 0
        %622 = vmatmul.mubr.bf16.gmra.mrb[0].mxu0 %v460
        %v623 = vpop.f32.mrb[0].mxu0
        %v624 = vadd.f32 0.0, %v623
        %v625 = vpop.f32.mrb[0].mxu0
        %v626 = vpop.f32.mrb[0].mxu0
        %v627 = vadd.f32 0.0, %v626
        %v628 = vpop.f32.mrb[0].mxu0
        %629 = vmatprep.mubr.bf16.mxu0 0
        %630 = vmatmul.mubr.bf16.gmra.mrb[0].mxu0 %v461
        %v631 = vpop.f32.mrb[0].mxu0
        %v632 = vadd.f32 0.0, %v631
        %v633 = vpop.f32.mrb[0].mxu0
        %v634 = vpop.f32.mrb[0].mxu0
        %v635 = vadd.f32 0.0, %v634
        %v636 = vpop.f32.mrb[0].mxu0
        %637 = vmatprep.mubr.bf16.mxu0 0
        %638 = vmatmul.mubr.bf16.gmra.mrb[0].mxu0 %v462
        %v639 = vpop.f32.mrb[0].mxu0
        %v640 = vadd.f32 0.0, %v639
        %v641 = vpop.f32.mrb[0].mxu0
        %v642 = vpop.f32.mrb[0].mxu0
        %v643 = vadd.f32 0.0, %v642
        %v644 = vpop.f32.mrb[0].mxu0
        %645 = vmatprep.mubr.bf16.mxu0 0
        %646 = vmatmul.mubr.bf16.gmra.mrb[0].mxu0 %v463
        %v647 = vpop.f32.mrb[0].mxu0
        %v648 = vadd.f32 0.0, %v647
        %v649 = vpop.f32.mrb[0].mxu0
        %v650 = vpop.f32.mrb[0].mxu0
        %v651 = vadd.f32 0.0, %v650
        %v652 = vpop.f32.mrb[0].mxu0
        %653 = vmatprep.mubr.bf16.mxu0 0
        %654 = vmatmul.mubr.bf16.gmra.mrb[0].mxu0 %v464
        %v655 = vpop.f32.mrb[0].mxu0
        %v656 = vadd.f32 0.0, %v655
        %v657 = vpop.f32.mrb[0].mxu0
        %v658 = vpop.f32.mrb[0].mxu0
        %v659 = vadd.f32 0.0, %v658
        %v660 = vpop.f32.mrb[0].mxu0
        %661 = vmatprep.mubr.bf16.mxu0 0
        %662 = vmatmul.mubr.bf16.gmra.mrb[0].mxu0 %v465
        %v663 = vpop.f32.mrb[0].mxu0
        %v664 = vadd.f32 0.0, %v663
        %v665 = vpop.f32.mrb[0].mxu0
        %v666 = vpop.f32.mrb[0].mxu0
        %v667 = vadd.f32 0.0, %v666
        %v668 = vpop.f32.mrb[0].mxu0
        %669 = vmatprep.mubr.bf16.mxu0 0
        %670 = vmatmul.mubr.bf16.gmra.mrb[0].mxu0 %v466
        %v671 = vpop.f32.mrb[0].mxu0
        %v672 = vadd.f32 0.0, %v671
        %v673 = vpop.f32.mrb[0].mxu0
        %v674 = vpop.f32.mrb[0].mxu0
        %v675 = vadd.f32 0.0, %v674
        %v676 = vpop.f32.mrb[0].mxu0
        %677 = vmatprep.mubr.bf16.mxu0 0
        %678 = vmatmul.mubr.bf16.gmra.mrb[0].mxu0 %v467
        %v679 = vpop.f32.mrb[0].mxu0
        %v680 = vadd.f32 0.0, %v679
        %v681 = vpop.f32.mrb[0].mxu0
        %v682 = vpop.f32.mrb[0].mxu0
        %v683 = vadd.f32 0.0, %v682
        %v684 = vpop.f32.mrb[0].mxu0
        %685 = vmatprep.mubr.bf16.mxu0 0
        %686 = vmatmul.mubr.bf16.gmra.mrb[0].mxu0 %v468
        %v687 = vpop.f32.mrb[0].mxu0
        %v688 = vadd.f32 0.0, %v687
        %v689 = vpop.f32.mrb[0].mxu0
        %v690 = vpop.f32.mrb[0].mxu0
        %v691 = vadd.f32 0.0, %v690
        %v692 = vpop.f32.mrb[0].mxu0
        %693 = vmatprep.mubr.bf16.mxu0 0
        %694 = vmatmul.mubr.bf16.gmra.mrb[0].mxu0 %v469
        %v695 = vpop.f32.mrb[0].mxu0
        %v696 = vadd.f32 0.0, %v695
        %v697 = vpop.f32.mrb[0].mxu0
        %v698 = vpop.f32.mrb[0].mxu0
        %v699 = vadd.f32 0.0, %v698
        %v700 = vpop.f32.mrb[0].mxu0
        %701 = vmatprep.mubr.bf16.mxu0 0
        %702 = vmatmul.mubr.bf16.gmra.mrb[0].mxu0 %v470
        %v703 = vpop.f32.mrb[0].mxu0
        %v704 = vadd.f32 0.0, %v703
        %v705 = vpop.f32.mrb[0].mxu0
        %v706 = vpop.f32.mrb[0].mxu0
        %v707 = vadd.f32 0.0, %v706
        %v708 = vpop.f32.mrb[0].mxu0
        %709 = vmatprep.mubr.bf16.mxu0 0
        %710 = vmatmul.mubr.bf16.gmra.mrb[0].mxu0 %v471
        %v711 = vpop.f32.mrb[0].mxu0
        %v712 = vadd.f32 0.0, %v711
        %v713 = vpop.f32.mrb[0].mxu0
        %v714 = vpop.f32.mrb[0].mxu0
        %v715 = vadd.f32 0.0, %v714
        %v716 = vpop.f32.mrb[0].mxu0
        %717 = vmatprep.mubr.bf16.mxu0 0
        %718 = vmatmul.mubr.bf16.gmra.mrb[0].mxu0 %v472
        %v719 = vpop.f32.mrb[0].mxu0
        %v720 = vadd.f32 0.0, %v719
        %v721 = vpop.f32.mrb[0].mxu0
        %v722 = vpop.f32.mrb[0].mxu0
        %v723 = vadd.f32 0.0, %v722
        %v724 = vpop.f32.mrb[0].mxu0
        %725 = vmatprep.mubr.bf16.mxu0 0
        %726 = vmatmul.mubr.bf16.gmra.mrb[0].mxu0 %v473
        %v727 = vpop.f32.mrb[0].mxu0
        %v728 = vadd.f32 0.0, %v727
        %v729 = vpop.f32.mrb[0].mxu0
        %v730 = vpop.f32.mrb[0].mxu0
        %v731 = vadd.f32 0.0, %v730
        %v732 = vpop.f32.mrb[0].mxu0
        %733 = vmatprep.mubr.bf16.mxu0 0
        %734 = vmatmul.mubr.bf16.gmra.mrb[0].mxu0 %v474
        %v735 = vpop.f32.mrb[0].mxu0
        %v736 = vadd.f32 0.0, %v735
        %v737 = vpop.f32.mrb[0].mxu0
        %v738 = vpop.f32.mrb[0].mxu0
        %v739 = vadd.f32 0.0, %v738
        %v740 = vpop.f32.mrb[0].mxu0
        %741 = vmatprep.mubr.bf16.mxu0 0
        %742 = vmatmul.mubr.bf16.gmra.mrb[0].mxu0 %v475
        %v743 = vpop.f32.mrb[0].mxu0
        %v744 = vadd.f32 0.0, %v743
        %v745 = vpop.f32.mrb[0].mxu0
        %v746 = vpop.f32.mrb[0].mxu0
        %v747 = vadd.f32 0.0, %v746
        %v748 = vpop.f32.mrb[0].mxu0
        %749 = vmatprep.mubr.bf16.mxu0 0
        %750 = vmatmul.mubr.bf16.gmra.mrb[0].mxu0 %v499
        %v751 = vpop.f32.mrb[0].mxu0
        %v752 = vadd.f32 0.0, %v751
        %v753 = vpop.f32.mrb[0].mxu0
        %v754 = vpop.f32.mrb[0].mxu0
        %v755 = vpop.f32.mrb[0].mxu0
        %756 = vdwg.mxu0
        %v757 = vld [vmem:[%s3] sm:$0x7]
        %v758 = vlaneseq
        %v759 = vshrl.u32 %v758, 7
        %v760 = vsub.s32 0, %v759
        %v761 = vrot.slane %v757, %v760
        %v762 = vmul.f32 %v600, %v761
        %v763 = vmul.f32 %v603, %v761
        %v764 = vmul.f32 %v608, %v761
        %v765 = vmul.f32 %v611, %v761
        %v766 = vmul.f32 %v616, %v761
        %v767 = vmul.f32 %v619, %v761
        %v768 = vmul.f32 %v624, %v761
        %v769 = vmul.f32 %v627, %v761
        %v770 = vmul.f32 %v632, %v761
        %v771 = vmul.f32 %v635, %v761
        %v772 = vmul.f32 %v640, %v761
        %v773 = vmul.f32 %v643, %v761
        %v774 = vmul.f32 %v648, %v761
        %v775 = vmul.f32 %v651, %v761
        %v776 = vmul.f32 %v656, %v761
        %v777 = vmul.f32 %v659, %v761
        %v778 = vmul.f32 %v664, %v761
        %v779 = vmul.f32 %v667, %v761
        %v780 = vmul.f32 %v672, %v761
        %v781 = vmul.f32 %v675, %v761
        %v782 = vmul.f32 %v680, %v761
        %v783 = vmul.f32 %v683, %v761
        %v784 = vmul.f32 %v688, %v761
        %v785 = vmul.f32 %v691, %v761
        %v786 = vmul.f32 %v696, %v761
        %v787 = vmul.f32 %v699, %v761
        %v788 = vmul.f32 %v704, %v761
        %v789 = vmul.f32 %v707, %v761
        %v790 = vmul.f32 %v712, %v761
        %v791 = vmul.f32 %v715, %v761
        %v792 = vmul.f32 %v720, %v761
        %v793 = vmul.f32 %v723, %v761
        %v794 = vmul.f32 %v728, %v761
        %v795 = vmul.f32 %v731, %v761
        %v796 = vmul.f32 %v736, %v761
        %v797 = vmul.f32 %v739, %v761
        %v798 = vmul.f32 %v744, %v761
        %v799 = vmul.f32 %v747, %v761
        %v800 = vrot.slane %v600, 1
        %v801 = vrot.slane %v603, 1
        %v802 = vrot.slane %v608, 1
        %v803 = vrot.slane %v611, 1
        %v804 = vrot.slane %v616, 1
        %v805 = vrot.slane %v619, 1
        %v806 = vrot.slane %v624, 1
        %v807 = vrot.slane %v627, 1
        %v808 = vrot.slane %v632, 1
        %v809 = vrot.slane %v635, 1
        %v810 = vrot.slane %v640, 1
        %v811 = vrot.slane %v643, 1
        %v812 = vrot.slane %v648, 1
        %v813 = vrot.slane %v651, 1
        %v814 = vrot.slane %v656, 1
        %v815 = vrot.slane %v659, 1
        %v816 = vrot.slane %v664, 1
        %v817 = vrot.slane %v667, 1
        %v818 = vrot.slane %v672, 1
        %v819 = vrot.slane %v675, 1
        %v820 = vrot.slane %v680, 1
        %v821 = vrot.slane %v683, 1
        %v822 = vrot.slane %v688, 1
        %v823 = vrot.slane %v691, 1
        %v824 = vrot.slane %v696, 1
        %v825 = vrot.slane %v699, 1
        %v826 = vrot.slane %v704, 1
        %v827 = vrot.slane %v707, 1
        %v828 = vrot.slane %v712, 1
        %v829 = vrot.slane %v715, 1
        %v830 = vrot.slane %v720, 1
        %v831 = vrot.slane %v723, 1
        %v832 = vrot.slane %v728, 1
        %v833 = vrot.slane %v731, 1
        %v834 = vrot.slane %v736, 1
        %v835 = vrot.slane %v739, 1
        %v836 = vrot.slane %v744, 1
        %v837 = vrot.slane %v747, 1
        %v838 = vrot.slane %v752, 1
        %v839 = vlaneseq
        %v840 = vshrl.u32 %v839, 7
        %vm841 = vcmp.lt.s32.totalorder %v840, 7
        %v842 = vsel %vm841, %v837, %v838
        %v843 = vsel %vm841, %v836, %v837
        %v844 = vsel %vm841, %v835, %v836
        %v845 = vsel %vm841, %v834, %v835
        %v846 = vsel %vm841, %v833, %v834
        %v847 = vsel %vm841, %v832, %v833
        %v848 = vsel %vm841, %v831, %v832
        %v849 = vsel %vm841, %v830, %v831
        %v850 = vsel %vm841, %v829, %v830
        %v851 = vsel %vm841, %v828, %v829
        %v852 = vsel %vm841, %v827, %v828
        %v853 = vsel %vm841, %v826, %v827
        %v854 = vsel %vm841, %v825, %v826
        %v855 = vsel %vm841, %v824, %v825
        %v856 = vsel %vm841, %v823, %v824
        %v857 = vsel %vm841, %v822, %v823
        %v858 = vsel %vm841, %v821, %v822
        %v859 = vsel %vm841, %v820, %v821
        %v860 = vsel %vm841, %v819, %v820
        %v861 = vsel %vm841, %v818, %v819
        %v862 = vsel %vm841, %v817, %v818
        %v863 = vsel %vm841, %v816, %v817
        %v864 = vsel %vm841, %v815, %v816
        %v865 = vsel %vm841, %v814, %v815
        %v866 = vsel %vm841, %v813, %v814
        %v867 = vsel %vm841, %v812, %v813
        %v868 = vsel %vm841, %v811, %v812
        %v869 = vsel %vm841, %v810, %v811
        %v870 = vsel %vm841, %v809, %v810
        %v871 = vsel %vm841, %v808, %v809
        %v872 = vsel %vm841, %v807, %v808
        %v873 = vsel %vm841, %v806, %v807
        %v874 = vsel %vm841, %v805, %v806
        %v875 = vsel %vm841, %v804, %v805
        %v876 = vsel %vm841, %v803, %v804
        %v877 = vsel %vm841, %v802, %v803
        %v878 = vsel %vm841, %v801, %v802
        %v879 = vsel %vm841, %v800, %v801
        %v880 = vlaneseq
        %v881 = vshrl.u32 %v880, 7
        %v882 = vsub.s32 1, %v881
        %v883 = vrot.slane %v757, %v882
        %v884 = vmul.f32 %v879, %v883
        %v885 = vmul.f32 %v878, %v883
        %v886 = vmul.f32 %v877, %v883
        %v887 = vmul.f32 %v876, %v883
        %v888 = vmul.f32 %v875, %v883
        %v889 = vmul.f32 %v874, %v883
        %v890 = vmul.f32 %v873, %v883
        %v891 = vmul.f32 %v872, %v883
        %v892 = vmul.f32 %v871, %v883
        %v893 = vmul.f32 %v870, %v883
        %v894 = vmul.f32 %v869, %v883
        %v895 = vmul.f32 %v868, %v883
        %v896 = vmul.f32 %v867, %v883
        %v897 = vmul.f32 %v866, %v883
        %v898 = vmul.f32 %v865, %v883
        %v899 = vmul.f32 %v864, %v883
        %v900 = vmul.f32 %v863, %v883
        %v901 = vmul.f32 %v862, %v883
        %v902 = vmul.f32 %v861, %v883
        %v903 = vmul.f32 %v860, %v883
        %v904 = vmul.f32 %v859, %v883
        %v905 = vmul.f32 %v858, %v883
        %v906 = vmul.f32 %v857, %v883
        %v907 = vmul.f32 %v856, %v883
        %v908 = vmul.f32 %v855, %v883
        %v909 = vmul.f32 %v854, %v883
        %v910 = vmul.f32 %v853, %v883
        %v911 = vmul.f32 %v852, %v883
        %v912 = vmul.f32 %v851, %v883
        %v913 = vmul.f32 %v850, %v883
        %v914 = vmul.f32 %v849, %v883
        %v915 = vmul.f32 %v848, %v883
        %v916 = vmul.f32 %v847, %v883
        %v917 = vmul.f32 %v846, %v883
        %v918 = vmul.f32 %v845, %v883
        %v919 = vmul.f32 %v844, %v883
        %v920 = vmul.f32 %v843, %v883
        %v921 = vmul.f32 %v842, %v883
        %v922 = vadd.f32 %v762, %v884
        %v923 = vadd.f32 %v763, %v885
        %v924 = vadd.f32 %v764, %v886
        %v925 = vadd.f32 %v765, %v887
        %v926 = vadd.f32 %v766, %v888
        %v927 = vadd.f32 %v767, %v889
        %v928 = vadd.f32 %v768, %v890
        %v929 = vadd.f32 %v769, %v891
        %v930 = vadd.f32 %v770, %v892
        %v931 = vadd.f32 %v771, %v893
        %v932 = vadd.f32 %v772, %v894
        %v933 = vadd.f32 %v773, %v895
        %v934 = vadd.f32 %v774, %v896
        %v935 = vadd.f32 %v775, %v897
        %v936 = vadd.f32 %v776, %v898
        %v937 = vadd.f32 %v777, %v899
        %v938 = vadd.f32 %v778, %v900
        %v939 = vadd.f32 %v779, %v901
        %v940 = vadd.f32 %v780, %v902
        %v941 = vadd.f32 %v781, %v903
        %v942 = vadd.f32 %v782, %v904
        %v943 = vadd.f32 %v783, %v905
        %v944 = vadd.f32 %v784, %v906
        %v945 = vadd.f32 %v785, %v907
        %v946 = vadd.f32 %v786, %v908
        %v947 = vadd.f32 %v787, %v909
        %v948 = vadd.f32 %v788, %v910
        %v949 = vadd.f32 %v789, %v911
        %v950 = vadd.f32 %v790, %v912
        %v951 = vadd.f32 %v791, %v913
        %v952 = vadd.f32 %v792, %v914
        %v953 = vadd.f32 %v793, %v915
        %v954 = vadd.f32 %v794, %v916
        %v955 = vadd.f32 %v795, %v917
        %v956 = vadd.f32 %v796, %v918
        %v957 = vadd.f32 %v797, %v919
        %v958 = vadd.f32 %v798, %v920
        %v959 = vadd.f32 %v799, %v921
        %v960 = vrot.slane %v600, 2
        %v961 = vrot.slane %v603, 2
        %v962 = vrot.slane %v608, 2
        %v963 = vrot.slane %v611, 2
        %v964 = vrot.slane %v616, 2
        %v965 = vrot.slane %v619, 2
        %v966 = vrot.slane %v624, 2
        %v967 = vrot.slane %v627, 2
        %v968 = vrot.slane %v632, 2
        %v969 = vrot.slane %v635, 2
        %v970 = vrot.slane %v640, 2
        %v971 = vrot.slane %v643, 2
        %v972 = vrot.slane %v648, 2
        %v973 = vrot.slane %v651, 2
        %v974 = vrot.slane %v656, 2
        %v975 = vrot.slane %v659, 2
        %v976 = vrot.slane %v664, 2
        %v977 = vrot.slane %v667, 2
        %v978 = vrot.slane %v672, 2
        %v979 = vrot.slane %v675, 2
        %v980 = vrot.slane %v680, 2
        %v981 = vrot.slane %v683, 2
        %v982 = vrot.slane %v688, 2
        %v983 = vrot.slane %v691, 2
        %v984 = vrot.slane %v696, 2
        %v985 = vrot.slane %v699, 2
        %v986 = vrot.slane %v704, 2
        %v987 = vrot.slane %v707, 2
        %v988 = vrot.slane %v712, 2
        %v989 = vrot.slane %v715, 2
        %v990 = vrot.slane %v720, 2
        %v991 = vrot.slane %v723, 2
        %v992 = vrot.slane %v728, 2
        %v993 = vrot.slane %v731, 2
        %v994 = vrot.slane %v736, 2
        %v995 = vrot.slane %v739, 2
        %v996 = vrot.slane %v744, 2
        %v997 = vrot.slane %v747, 2
        %v998 = vrot.slane %v752, 2
        %vm999 = vcmp.lt.s32.totalorder %v840, 6
        %v1000 = vsel %vm999, %v997, %v998
        %v1001 = vsel %vm999, %v996, %v997
        %v1002 = vsel %vm999, %v995, %v996
        %v1003 = vsel %vm999, %v994, %v995
        %v1004 = vsel %vm999, %v993, %v994
        %v1005 = vsel %vm999, %v992, %v993
        %v1006 = vsel %vm999, %v991, %v992
        %v1007 = vsel %vm999, %v990, %v991
        %v1008 = vsel %vm999, %v989, %v990
        %v1009 = vsel %vm999, %v988, %v989
        %v1010 = vsel %vm999, %v987, %v988
        %v1011 = vsel %vm999, %v986, %v987
        %v1012 = vsel %vm999, %v985, %v986
        %v1013 = vsel %vm999, %v984, %v985
        %v1014 = vsel %vm999, %v983, %v984
        %v1015 = vsel %vm999, %v982, %v983
        %v1016 = vsel %vm999, %v981, %v982
        %v1017 = vsel %vm999, %v980, %v981
        %v1018 = vsel %vm999, %v979, %v980
        %v1019 = vsel %vm999, %v978, %v979
        %v1020 = vsel %vm999, %v977, %v978
        %v1021 = vsel %vm999, %v976, %v977
        %v1022 = vsel %vm999, %v975, %v976
        %v1023 = vsel %vm999, %v974, %v975
        %v1024 = vsel %vm999, %v973, %v974
        %v1025 = vsel %vm999, %v972, %v973
        %v1026 = vsel %vm999, %v971, %v972
        %v1027 = vsel %vm999, %v970, %v971
        %v1028 = vsel %vm999, %v969, %v970
        %v1029 = vsel %vm999, %v968, %v969
        %v1030 = vsel %vm999, %v967, %v968
        %v1031 = vsel %vm999, %v966, %v967
        %v1032 = vsel %vm999, %v965, %v966
        %v1033 = vsel %vm999, %v964, %v965
        %v1034 = vsel %vm999, %v963, %v964
        %v1035 = vsel %vm999, %v962, %v963
        %v1036 = vsel %vm999, %v961, %v962
        %v1037 = vsel %vm999, %v960, %v961
        %v1038 = vlaneseq
        %v1039 = vshrl.u32 %v1038, 7
        %v1040 = vsub.s32 2, %v1039
        %v1041 = vrot.slane %v757, %v1040
        %v1042 = vmul.f32 %v1037, %v1041
        %v1043 = vmul.f32 %v1036, %v1041
        %v1044 = vmul.f32 %v1035, %v1041
        %v1045 = vmul.f32 %v1034, %v1041
        %v1046 = vmul.f32 %v1033, %v1041
        %v1047 = vmul.f32 %v1032, %v1041
        %v1048 = vmul.f32 %v1031, %v1041
        %v1049 = vmul.f32 %v1030, %v1041
        %v1050 = vmul.f32 %v1029, %v1041
        %v1051 = vmul.f32 %v1028, %v1041
        %v1052 = vmul.f32 %v1027, %v1041
        %v1053 = vmul.f32 %v1026, %v1041
        %v1054 = vmul.f32 %v1025, %v1041
        %v1055 = vmul.f32 %v1024, %v1041
        %v1056 = vmul.f32 %v1023, %v1041
        %v1057 = vmul.f32 %v1022, %v1041
        %v1058 = vmul.f32 %v1021, %v1041
        %v1059 = vmul.f32 %v1020, %v1041
        %v1060 = vmul.f32 %v1019, %v1041
        %v1061 = vmul.f32 %v1018, %v1041
        %v1062 = vmul.f32 %v1017, %v1041
        %v1063 = vmul.f32 %v1016, %v1041
        %v1064 = vmul.f32 %v1015, %v1041
        %v1065 = vmul.f32 %v1014, %v1041
        %v1066 = vmul.f32 %v1013, %v1041
        %v1067 = vmul.f32 %v1012, %v1041
        %v1068 = vmul.f32 %v1011, %v1041
        %v1069 = vmul.f32 %v1010, %v1041
        %v1070 = vmul.f32 %v1009, %v1041
        %v1071 = vmul.f32 %v1008, %v1041
        %v1072 = vmul.f32 %v1007, %v1041
        %v1073 = vmul.f32 %v1006, %v1041
        %v1074 = vmul.f32 %v1005, %v1041
        %v1075 = vmul.f32 %v1004, %v1041
        %v1076 = vmul.f32 %v1003, %v1041
        %v1077 = vmul.f32 %v1002, %v1041
        %v1078 = vmul.f32 %v1001, %v1041
        %v1079 = vmul.f32 %v1000, %v1041
        %v1080 = vadd.f32 %v922, %v1042
        %v1081 = vadd.f32 %v923, %v1043
        %v1082 = vadd.f32 %v924, %v1044
        %v1083 = vadd.f32 %v925, %v1045
        %v1084 = vadd.f32 %v926, %v1046
        %v1085 = vadd.f32 %v927, %v1047
        %v1086 = vadd.f32 %v928, %v1048
        %v1087 = vadd.f32 %v929, %v1049
        %v1088 = vadd.f32 %v930, %v1050
        %v1089 = vadd.f32 %v931, %v1051
        %v1090 = vadd.f32 %v932, %v1052
        %v1091 = vadd.f32 %v933, %v1053
        %v1092 = vadd.f32 %v934, %v1054
        %v1093 = vadd.f32 %v935, %v1055
        %v1094 = vadd.f32 %v936, %v1056
        %v1095 = vadd.f32 %v937, %v1057
        %v1096 = vadd.f32 %v938, %v1058
        %v1097 = vadd.f32 %v939, %v1059
        %v1098 = vadd.f32 %v940, %v1060
        %v1099 = vadd.f32 %v941, %v1061
        %v1100 = vadd.f32 %v942, %v1062
        %v1101 = vadd.f32 %v943, %v1063
        %v1102 = vadd.f32 %v944, %v1064
        %v1103 = vadd.f32 %v945, %v1065
        %v1104 = vadd.f32 %v946, %v1066
        %v1105 = vadd.f32 %v947, %v1067
        %v1106 = vadd.f32 %v948, %v1068
        %v1107 = vadd.f32 %v949, %v1069
        %v1108 = vadd.f32 %v950, %v1070
        %v1109 = vadd.f32 %v951, %v1071
        %v1110 = vadd.f32 %v952, %v1072
        %v1111 = vadd.f32 %v953, %v1073
        %v1112 = vadd.f32 %v954, %v1074
        %v1113 = vadd.f32 %v955, %v1075
        %v1114 = vadd.f32 %v956, %v1076
        %v1115 = vadd.f32 %v957, %v1077
        %v1116 = vadd.f32 %v958, %v1078
        %v1117 = vadd.f32 %v959, %v1079
        %v1118 = vld [vmem:[%s4] sm:$0x1]
        %v1120 = vlaneseq
        %v1121 = vshrl.u32 %v1120, 7
        %v1122 = vsub.s32 0, %v1121
        %v1123 = vrot.slane %v1118, %v1122
        %v1125 = vadd.f32 %v1080, %v1123
        %v1126 = vadd.f32 %v1081, %v1123
        %v1127 = vadd.f32 %v1082, %v1123
        %v1128 = vadd.f32 %v1083, %v1123
        %v1129 = vadd.f32 %v1084, %v1123
        %v1130 = vadd.f32 %v1085, %v1123
        %v1131 = vadd.f32 %v1086, %v1123
        %v1132 = vadd.f32 %v1087, %v1123
        %v1133 = vadd.f32 %v1088, %v1123
        %v1134 = vadd.f32 %v1089, %v1123
        %v1135 = vadd.f32 %v1090, %v1123
        %v1136 = vadd.f32 %v1091, %v1123
        %v1137 = vadd.f32 %v1092, %v1123
        %v1138 = vadd.f32 %v1093, %v1123
        %v1139 = vadd.f32 %v1094, %v1123
        %v1140 = vadd.f32 %v1095, %v1123
        %v1141 = vadd.f32 %v1096, %v1123
        %v1142 = vadd.f32 %v1097, %v1123
        %v1143 = vadd.f32 %v1098, %v1123
        %v1144 = vadd.f32 %v1099, %v1123
        %v1145 = vadd.f32 %v1100, %v1123
        %v1146 = vadd.f32 %v1101, %v1123
        %v1147 = vadd.f32 %v1102, %v1123
        %v1148 = vadd.f32 %v1103, %v1123
        %v1149 = vadd.f32 %v1104, %v1123
        %v1150 = vadd.f32 %v1105, %v1123
        %v1151 = vadd.f32 %v1106, %v1123
        %v1152 = vadd.f32 %v1107, %v1123
        %v1153 = vadd.f32 %v1108, %v1123
        %v1154 = vadd.f32 %v1109, %v1123
        %v1155 = vadd.f32 %v1110, %v1123
        %v1156 = vadd.f32 %v1111, %v1123
        %v1157 = vadd.f32 %v1112, %v1123
        %v1158 = vadd.f32 %v1113, %v1123
        %v1159 = vadd.f32 %v1114, %v1123
        %v1160 = vadd.f32 %v1115, %v1123
        %v1161 = vadd.f32 %v1116, %v1123
        %v1162 = vadd.f32 %v1117, %v1123
        %v1163 = vpack.c.bf16 %v1126, %v1125
        %v1164 = vpack.c.bf16 %v1128, %v1127
        %v1165 = vpack.c.bf16 %v1130, %v1129
        %v1166 = vpack.c.bf16 %v1132, %v1131
        %v1167 = vpack.c.bf16 %v1134, %v1133
        %v1168 = vpack.c.bf16 %v1136, %v1135
        %v1169 = vpack.c.bf16 %v1138, %v1137
        %v1170 = vpack.c.bf16 %v1140, %v1139
        %v1171 = vpack.c.bf16 %v1142, %v1141
        %v1172 = vpack.c.bf16 %v1144, %v1143
        %v1173 = vpack.c.bf16 %v1146, %v1145
        %v1174 = vpack.c.bf16 %v1148, %v1147
        %v1175 = vpack.c.bf16 %v1150, %v1149
        %v1176 = vpack.c.bf16 %v1152, %v1151
        %v1177 = vpack.c.bf16 %v1154, %v1153
        %v1178 = vpack.c.bf16 %v1156, %v1155
        %v1179 = vpack.c.bf16 %v1158, %v1157
        %v1180 = vpack.c.bf16 %v1160, %v1159
        %v1181 = vpack.c.bf16 %v1162, %v1161
        %v1201 = vunpack.c.l.b16 %v1163
        %v1202 = vunpack.c.h.b16 %v1163
        %v1203 = vunpack.c.l.b16 %v1164
        %v1204 = vunpack.c.h.b16 %v1164
        %v1205 = vunpack.c.l.b16 %v1165
        %v1206 = vunpack.c.h.b16 %v1165
        %v1207 = vunpack.c.l.b16 %v1166
        %v1208 = vunpack.c.h.b16 %v1166
        %v1209 = vunpack.c.l.b16 %v1167
        %v1210 = vunpack.c.h.b16 %v1167
        %v1211 = vunpack.c.l.b16 %v1168
        %v1212 = vunpack.c.h.b16 %v1168
        %v1213 = vunpack.c.l.b16 %v1169
        %v1214 = vunpack.c.h.b16 %v1169
        %v1215 = vunpack.c.l.b16 %v1170
        %v1216 = vunpack.c.h.b16 %v1170
        %v1217 = vunpack.c.l.b16 %v1171
        %v1218 = vunpack.c.h.b16 %v1171
        %v1219 = vunpack.c.l.b16 %v1172
        %v1220 = vunpack.c.h.b16 %v1172
        %v1221 = vunpack.c.l.b16 %v1173
        %v1222 = vunpack.c.h.b16 %v1173
        %v1223 = vunpack.c.l.b16 %v1174
        %v1224 = vunpack.c.h.b16 %v1174
        %v1225 = vunpack.c.l.b16 %v1175
        %v1226 = vunpack.c.h.b16 %v1175
        %v1227 = vunpack.c.l.b16 %v1176
        %v1228 = vunpack.c.h.b16 %v1176
        %v1229 = vunpack.c.l.b16 %v1177
        %v1230 = vunpack.c.h.b16 %v1177
        %v1231 = vunpack.c.l.b16 %v1178
        %v1232 = vunpack.c.h.b16 %v1178
        %v1233 = vunpack.c.l.b16 %v1179
        %v1234 = vunpack.c.h.b16 %v1179
        %v1235 = vunpack.c.l.b16 %v1180
        %v1236 = vunpack.c.h.b16 %v1180
        %v1237 = vunpack.c.l.b16 %v1181
        %v1238 = vunpack.c.h.b16 %v1181
        %v1239 = vpack.c.b16 %v1201, %v1201
        %v1240 = vpack.c.b16 %v1202, %v1202
        %v1241 = vpack.c.b16 %v1203, %v1203
        %v1242 = vpack.c.b16 %v1204, %v1204
        %v1243 = vpack.c.b16 %v1205, %v1205
        %v1244 = vpack.c.b16 %v1206, %v1206
        %v1245 = vpack.c.b16 %v1207, %v1207
        %v1246 = vpack.c.b16 %v1208, %v1208
        %v1247 = vpack.c.b16 %v1209, %v1209
        %v1248 = vpack.c.b16 %v1210, %v1210
        %v1249 = vpack.c.b16 %v1211, %v1211
        %v1250 = vpack.c.b16 %v1212, %v1212
        %v1251 = vpack.c.b16 %v1213, %v1213
        %v1252 = vpack.c.b16 %v1214, %v1214
        %v1253 = vpack.c.b16 %v1215, %v1215
        %v1254 = vpack.c.b16 %v1216, %v1216
        %v1255 = vpack.c.b16 %v1217, %v1217
        %v1256 = vpack.c.b16 %v1218, %v1218
        %v1257 = vpack.c.b16 %v1219, %v1219
        %v1258 = vpack.c.b16 %v1220, %v1220
        %v1259 = vpack.c.b16 %v1221, %v1221
        %v1260 = vpack.c.b16 %v1222, %v1222
        %v1261 = vpack.c.b16 %v1223, %v1223
        %v1262 = vpack.c.b16 %v1224, %v1224
        %v1263 = vpack.c.b16 %v1225, %v1225
        %v1264 = vpack.c.b16 %v1226, %v1226
        %v1265 = vpack.c.b16 %v1227, %v1227
        %v1266 = vpack.c.b16 %v1228, %v1228
        %v1267 = vpack.c.b16 %v1229, %v1229
        %v1268 = vpack.c.b16 %v1230, %v1230
        %v1269 = vpack.c.b16 %v1231, %v1231
        %v1270 = vpack.c.b16 %v1232, %v1232
        %v1271 = vpack.c.b16 %v1233, %v1233
        %v1272 = vpack.c.b16 %v1234, %v1234
        %v1273 = vpack.c.b16 %v1235, %v1235
        %v1274 = vpack.c.b16 %v1236, %v1236
        %v1275 = vpack.c.b16 %v1237, %v1237
        %v1276 = vpack.c.b16 %v1238, %v1238
        %1315 = vst [vmem:[%s330] sm:$0xf] %v1239
        %1316 = vst [vmem:[%s330 + $0x4] sm:$0xf] %v1240
        %1317 = vst [vmem:[%s330 + $0x8] sm:$0xf] %v1241
        %1318 = vst [vmem:[%s330 + $0xc] sm:$0xf] %v1242
        %1319 = vst [vmem:[%s330 + $0x10] sm:$0xf] %v1243
        %1320 = vst [vmem:[%s330 + $0x14] sm:$0xf] %v1244
        %1321 = vst [vmem:[%s330 + $0x18] sm:$0xf] %v1245
        %1322 = vst [vmem:[%s330 + $0x1c] sm:$0xf] %v1246
        %1323 = vst [vmem:[%s330 + $0x20] sm:$0xf] %v1247
        %1324 = vst [vmem:[%s330 + $0x24] sm:$0xf] %v1248
        %1325 = vst [vmem:[%s330 + $0x28] sm:$0xf] %v1249
        %1326 = vst [vmem:[%s330 + $0x2c] sm:$0xf] %v1250
        %1327 = vst [vmem:[%s330 + $0x30] sm:$0xf] %v1251
        %1328 = vst [vmem:[%s330 + $0x34] sm:$0xf] %v1252
        %1329 = vst [vmem:[%s330 + $0x38] sm:$0xf] %v1253
        %1330 = vst [vmem:[%s330 + $0x3c] sm:$0xf] %v1254
        %1331 = vst [vmem:[%s330 + $0x40] sm:$0xf] %v1255
        %1332 = vst [vmem:[%s330 + $0x44] sm:$0xf] %v1256
        %1333 = vst [vmem:[%s330 + $0x48] sm:$0xf] %v1257
        %1334 = vst [vmem:[%s330 + $0x4c] sm:$0xf] %v1258
        %1335 = vst [vmem:[%s330 + $0x50] sm:$0xf] %v1259
        %1336 = vst [vmem:[%s330 + $0x54] sm:$0xf] %v1260
        %1337 = vst [vmem:[%s330 + $0x58] sm:$0xf] %v1261
        %1338 = vst [vmem:[%s330 + $0x5c] sm:$0xf] %v1262
        %1339 = vst [vmem:[%s330 + $0x60] sm:$0xf] %v1263
        %1340 = vst [vmem:[%s330 + $0x64] sm:$0xf] %v1264
        %1341 = vst [vmem:[%s330 + $0x68] sm:$0xf] %v1265
        %1342 = vst [vmem:[%s330 + $0x6c] sm:$0xf] %v1266
        %1343 = vst [vmem:[%s330 + $0x70] sm:$0xf] %v1267
        %1344 = vst [vmem:[%s330 + $0x74] sm:$0xf] %v1268
        %1345 = vst [vmem:[%s330 + $0x78] sm:$0xf] %v1269
        %1346 = vst [vmem:[%s330 + $0x7c] sm:$0xf] %v1270
        %1347 = vst [vmem:[%s330 + $0x80] sm:$0xf] %v1271
        %1348 = vst [vmem:[%s330 + $0x84] sm:$0xf] %v1272
        %1349 = vst [vmem:[%s330 + $0x88] sm:$0xf] %v1273
        %1350 = vst [vmem:[%s330 + $0x8c] sm:$0xf] %v1274
        %1351 = vst [vmem:[%s330 + $0x90] sm:$0xf] %v1275
        %1352 = vst [vmem:[%s330 + $0x94] sm:$0xf] %v1276
        %s1353 = sand.u32 %s170, 1
        %s1354 = scalar_lea.sflag [#allocation4], %s1353
        %s1355 = sand.u32 %s170, 1
        %s1356 = smul.addr %s1355, 152
        %s1357 = scalar_lea.vmem [#allocation8], %s1356
        // Predicated region
        $region53: #{tpu_custom_call.1} parent=39 // pred_check
          %p1358 = pneg %p180
        $region54: #{tpu_custom_call.1} parent=39 // pred_check_branch
          %1360 = sbr.rel (%p1358) target = $region56
        $region55: #{tpu_custom_call.1} parent=39 // pred_region
          %s1361 = smul.u32 38, %s30
          %s1363 = ssub.s32 2432, 2432
          %1364 = vsyncadd %s1354, %s1363
          %s1365 = smul.addr %s29, 38
          %s1366 = sadd.s32 %s1361, %s1365
          %s1367 = smul.addr %s1366, 64
          %s1368 = scalar_lea.hbm %s5, %s1367
          %s1369 = sshll.u32 %s1357, 4
          %s1370 = int_to_ptr.vmem [resolvable:$true] %s1369
          %1375 = dma.vmem_to_hbm [thread:$0]  %s1370, 2432, %s1368, %s1354, 64, 64, 4
        $region56: #{tpu_custom_call.1} parent=39 // pred_fallthru
          _
      $region40: #{tpu_custom_call.1} parent=5 // pred_fallthru
        _
      %p1376 = scmp.le.s32.totalorder 2, %s20
      // Predicated region
      $region57: #{tpu_custom_call.1} parent=5 // pred_check
        %p1377 = pneg %p1376
      $region58: #{tpu_custom_call.1} parent=5 // pred_check_branch
        %1379 = sbr.rel (%p1377) target = $region60
      $region59: #{tpu_custom_call.1} parent=5 // pred_region
        %s1380 = ssub.s32 %s20, 2
        // Predicated region
        $region61: #{tpu_custom_call.1} parent=59 // pred_check
          %p1381 = pneg %p186
        $region62: #{tpu_custom_call.1} parent=59 // pred_check_branch
          %1383 = sbr.rel (%p1381) target = $region64
        $region63: #{tpu_custom_call.1} parent=59 // pred_region
          %s1384 = sand.u32 %s171, 1
          %s1385 = scalar_lea.sflag [#allocation4], %s1384
          %s1386 = sand.u32 %s171, 1
          %s1387 = smul.addr %s1386, 152
          %s1388 = scalar_lea.vmem [#allocation8], %s1387
          %1389 = dma.done %s1385, 2432
        $region64: #{tpu_custom_call.1} parent=59 // pred_fallthru
          _
      $region60: #{tpu_custom_call.1} parent=5 // pred_fallthru
        _
    $region6: #{tpu_custom_call.1} parent=1 // loop_footer
      %s24 = sadd.s32 1, %s20
    $region7: #{tpu_custom_call.1} parent=1 // loop_footer_branch
      %19 = sbr.rel target = $region3
    $region8: #{tpu_custom_call.1} parent=1 // loop_exit
      _
    %1390 = vsyncpa [#allocation3], 1
    %s1391 = scalar_lea.sflag [#allocation3], 1
    %1392 = vsyncpa %s1391, 1
    %1393 = vsyncpa [#allocation6], 1
    %s1394 = scalar_lea.sflag [#allocation6], 1
    %1395 = vsyncpa %s1394, 1
    %1396 = vsyncpa [#allocation4], 1
    %s1397 = scalar_lea.sflag [#allocation4], 1
    %1398 = vsyncpa %s1397, 1

</llo_original>
